<compile_context>
chip_gen: v7x
topology: tpu7x:2x2x1
jax: 0.10.0
libtpu: 0.0.40
codegen_flags: <defaults>
</compile_context>

<pallas_src>
import jax
import jax.numpy as jnp
from jax.experimental import pallas as pl
from jax.experimental.pallas import tpu as pltpu


def _round_up(x: int, m: int) -> int:
    return ((x + m - 1) // m) * m


def _make_kernel_rowmajor(threshold: float):
    """Small-B kernel: output laid out (tile_b, N) like the module."""
    thr = float(threshold)

    def kernel(clue_ref, opt_ref, out_ref):
        # clue_ref: (tile_b, E), opt_ref: (N, E) -> sims (tile_b, N)
        sims = jax.lax.dot_general(
            clue_ref[...], opt_ref[...],
            dimension_numbers=(((1,), (1,)), ((), ())),
            preferred_element_type=jnp.float32)
        pred = jax.nn.sigmoid(sims)                      # EUP
        out_ref[...] = jnp.clip(pred - thr, 0.001, 1.0).astype(out_ref.dtype)

    return kernel


def _make_kernel_lanedense(threshold: float):
    """Large-B kernel: output laid out (N, tile_b) -- batch on the lane axis
    so stores are full-width (unmasked) vst."""
    thr = float(threshold)

    def kernel(clue_ref, opt_ref, out_ref):
        # opt_ref: (N, E), clue_ref: (tile_b, E) -> sims (N, tile_b)
        sims = jax.lax.dot_general(
            opt_ref[...], clue_ref[...],
            dimension_numbers=(((1,), (1,)), ((), ())),
            preferred_element_type=jnp.float32)
        pred = jax.nn.sigmoid(sims)                      # EUP
        out_ref[...] = jnp.clip(pred - thr, 0.001, 1.0).astype(out_ref.dtype)

    return kernel


def similarity_threshold_policy(clue_vector, W, threshold, options_matrix,
                                *, max_tile_b: int = 4096,
                                min_pallas_batch: int = 512,
                                force_pallas: bool = False):
    """clue_vector: (B, E) (B==1 matches the PyTorch module), W: (E, E),
    threshold: python scalar (compile-time constant), options_matrix: (N, E).
    Returns (B, N) float32."""
    clue = jnp.asarray(clue_vector, jnp.float32)
    W = jnp.asarray(W, jnp.float32)
    opts = jnp.asarray(options_matrix, jnp.float32)

    B, E = clue.shape
    N, E2 = opts.shape
    assert E == E2 and W.shape == (E, E)
    thr = float(threshold)

    # Fold W into the options once:  clue @ W @ opts.T == clue @ (opts @ W.T).T
    # One-time N*E*E FLOPs in XLA; removes the dependent MXU chain in-kernel.
    options_w = opts @ W.T                                # (N, E)

    if B < min_pallas_batch and not force_pallas:
        # Tiny B (incl. the module-exact B==1): fused XLA beats kernel overhead.
        return jnp.clip(jax.nn.sigmoid(clue @ options_w.T) - thr, 0.001, 1.0)

    if B < 128:
        # Forced tiny-B Pallas path: single full-extent block, row-major output.
        kernel = _make_kernel_rowmajor(thr)
        return pl.pallas_call(
            kernel,
            out_shape=jax.ShapeDtypeStruct((B, N), jnp.float32),
            grid=(1,),
            in_specs=[
                pl.BlockSpec((B, E), lambda i: (0, 0)),   # clue (full extent)
                pl.BlockSpec((N, E), lambda i: (0, 0)),   # folded options
            ],
            out_specs=pl.BlockSpec((B, N), lambda i: (0, 0)),
        )(clue, options_w)

    # ---- large-B, lane-dense path ----------------------------------------
    tile_b = min(int(max_tile_b), _round_up(B, 128))
    # Keep >= 2 grid steps so the "parallel" batch axis can shard across the
    # two TensorCores on v7x (harmless on v5e/v6e).
    if pl.cdiv(B, tile_b) < 2 and B >= 256:
        tile_b = _round_up(pl.cdiv(B, 2), 128)
    grid_b = pl.cdiv(B, tile_b)

    kernel = _make_kernel_lanedense(thr)
    out_t = pl.pallas_call(
        kernel,
        out_shape=jax.ShapeDtypeStruct((N, B), jnp.float32),
        grid=(grid_b,),
        in_specs=[
            pl.BlockSpec((tile_b, E), lambda i: (i, 0)),  # clue batch tile
            pl.BlockSpec((N, E), lambda i: (0, 0)),       # folded options (resident)
        ],
        out_specs=pl.BlockSpec((N, tile_b), lambda i: (0, i)),  # lane-dense
        compiler_params=pltpu.CompilerParams(
            dimension_semantics=("parallel",)),           # 2x on v7x megacore
    )(clue, options_w)
    return out_t.T                                        # (B, N); tiny transpose


def make_params(embed_size):
    """Deterministic parameter init matching nn.init.eye_ and threshold=0.01."""
    W = jnp.eye(embed_size, dtype=jnp.float32)
    threshold = 0.01
    return W, threshold


def _reference(clue_vector, W, threshold, options_matrix):
    return jnp.clip(
        jax.nn.sigmoid(clue_vector @ W @ options_matrix.T) - threshold,
        0.001, 1.0)


if __name__ == "__main__":
    embed_size = 32   # E
    num_words = 8     # N (remaining unguessed words on the board)

    key = jax.random.PRNGKey(0)
    k_clue, k_opts, k_b1, k_b2 = jax.random.split(key, 4)
    options_matrix = jax.random.normal(k_opts, (num_words, embed_size),
                                       dtype=jnp.float32)
    W, threshold = make_params(embed_size)

    # --- module-exact case: single clue (B = 1), forced through the kernel ---
    clue_vector = jax.random.normal(k_clue, (1, embed_size), dtype=jnp.float32)
    out1 = similarity_threshold_policy(clue_vector, W, threshold,
                                       options_matrix, force_pallas=True)
    out1 = jax.block_until_ready(out1)
    ref1 = _reference(clue_vector, W, threshold, options_matrix)
    assert out1.shape == (1, num_words)
    assert jnp.allclose(out1, ref1, atol=1e-5, rtol=1e-5), (
        float(jnp.max(jnp.abs(out1 - ref1))))

    # Default gate: tiny B goes through the fused XLA path.
    out1x = jax.block_until_ready(
        similarity_threshold_policy(clue_vector, W, threshold, options_matrix))
    assert jnp.allclose(out1x, ref1, atol=1e-5, rtol=1e-5)

    # --- batched clue candidates: lane-dense Pallas path -------------------
    #   3072 -> two full tiles; 3000 -> partial final tile (no wrapper pad).
    for batch, kb in ((3072, k_b1), (3000, k_b2)):
        clue_batch = jax.random.normal(kb, (batch, embed_size),
                                       dtype=jnp.float32)
        out_b = jax.block_until_ready(
            similarity_threshold_policy(clue_batch, W, threshold,
                                        options_matrix))
        ref_b = _reference(clue_batch, W, threshold, options_matrix)
        assert out_b.shape == (batch, num_words)
        assert jnp.allclose(out_b, ref_b, atol=1e-5, rtol=1e-5), (
            float(jnp.max(jnp.abs(out_b - ref_b))))

    print("KERNEL_OK")
</pallas_src>

<mosaic_0001>
module attributes {stable_mosaic.version = 11 : i64} {
  func.func @kernel(%arg0: i32, %arg1: memref<1x32xf32, #tpu.memory_space<vmem>>, %arg2: memref<8x32xf32, #tpu.memory_space<vmem>>, %arg3: memref<1x8xf32, #tpu.memory_space<vmem>>) attributes {dimension_semantics = [#tpu.dimension_semantics<arbitrary>], iteration_bounds = array<i64: 1>, scalar_prefetch = 0 : i64, scratch_operands = 0 : i64, tpu.core_type = #tpu.core_type<tc>, window_params = [{pipeline_mode = #tpu.pipeline_mode<synchronous>, transform_indices = @transform_0, window_bounds = array<i64: 1, 32>}, {pipeline_mode = #tpu.pipeline_mode<synchronous>, transform_indices = @transform_1, window_bounds = array<i64: 8, 32>}, {pipeline_mode = #tpu.pipeline_mode<synchronous>, transform_indices = @transform_2, window_bounds = array<i64: 1, 8>}]} {
    %c0 = arith.constant 0 : index
    %c0_0 = arith.constant 0 : index
    %0 = vector.load %arg1[%c0, %c0_0] : memref<1x32xf32, #tpu.memory_space<vmem>>, vector<1x32xf32>
    %c0_1 = arith.constant 0 : index
    %c0_2 = arith.constant 0 : index
    %1 = vector.load %arg2[%c0_1, %c0_2] : memref<8x32xf32, #tpu.memory_space<vmem>>, vector<8x32xf32>
    %cst = arith.constant dense<0.000000e+00> : vector<1x8xf32>
    %2 = tpu.matmul %0, %1, %cst {dimension_numbers = #tpu.dot_dimension_numbers<[1], [1], [0], [0], [0, 0, 1, 0], [], []>} : vector<1x32xf32>, vector<8x32xf32>, vector<1x8xf32> -> vector<1x8xf32>
    %3 = arith.negf %2 : vector<1x8xf32>
    %4 = math.exp %3 : vector<1x8xf32>
    %cst_3 = arith.constant 1.000000e+00 : f32
    %5 = vector.broadcast %cst_3 : f32 to vector<1x8xf32>
    %6 = arith.addf %5, %4 : vector<1x8xf32>
    %7 = arith.divf %5, %6 : vector<1x8xf32>
    %cst_4 = arith.constant 0.00999999977 : f32
    %8 = vector.broadcast %cst_4 : f32 to vector<1x8xf32>
    %9 = arith.subf %7, %8 : vector<1x8xf32>
    %cst_5 = arith.constant 1.000000e-03 : f32
    %cst_6 = arith.constant 1.000000e+00 : f32
    %10 = vector.broadcast %cst_5 : f32 to vector<1x8xf32>
    %11 = arith.maximumf %10, %9 : vector<1x8xf32>
    %12 = vector.broadcast %cst_6 : f32 to vector<1x8xf32>
    %13 = arith.minimumf %12, %11 : vector<1x8xf32>
    %c0_7 = arith.constant 0 : index
    %c0_8 = arith.constant 0 : index
    %14 = vector.load %arg3[%c0_7, %c0_8] : memref<1x8xf32, #tpu.memory_space<vmem>>, vector<1x8xf32>
    tpu.vector_store %arg3[%c0_7, %c0_8], %13 {strides = array<i32>} : memref<1x8xf32, #tpu.memory_space<vmem>>, vector<1x8xf32>,
    return
  }
  func.func @transform_0(%arg0: i32) -> (i32, i32) {
    %c0_i32 = arith.constant 0 : i32
    %c0_i32_0 = arith.constant 0 : i32
    %c0_i32_1 = arith.constant 0 : i32
    return %c0_i32, %c0_i32_0 : i32, i32
  }
  func.func @transform_1(%arg0: i32) -> (i32, i32) {
    %c0_i32 = arith.constant 0 : i32
    %c0_i32_0 = arith.constant 0 : i32
    %c0_i32_1 = arith.constant 0 : i32
    return %c0_i32, %c0_i32_0 : i32, i32
  }
  func.func @transform_2(%arg0: i32) -> (i32, i32) {
    %c0_i32 = arith.constant 0 : i32
    %c0_i32_0 = arith.constant 0 : i32
    %c0_i32_1 = arith.constant 0 : i32
    return %c0_i32, %c0_i32_0 : i32, i32
  }
}

</mosaic_0001>

<llo_original>
// kernel: tpu_custom_call.1
$region0: #{tpu_custom_call.1}
  #allocation0 [shape = 'u32[]', space=smem, size = 0x4, offset = 0x4, fixed_abs, tag = 'smem constant byte address 0x4 - core index']
  #allocation1 [shape = 'u32[144,128]{1,0:T(1,128)}', space=vmem, size = 0x12000, scoped, tag = 'internal scratch']
  %s0 = inlined_call_operand.hbm [shape: f32[1,32], index: 0, kind: input, shape index: {}]
  %s1 = inlined_call_operand.hbm [shape: f32[8,32], index: 1, kind: input, shape index: {}]
  %s2 = inlined_call_operand.hbm [shape: f32[1,8], index: 2, kind: output, shape index: {}]
  %s3 = sld [smem:[#allocation0]]
  $region26: #{tpu_custom_call.1} parent=0
    _
  %s5 = ssub.s32 1, %s3
  %s6 = scalar_select 0, %s5, %s3
  $region1: #{tpu_custom_call.1} parent=0
    #allocation2 [shape = 'u8[512]{0}', space=vmem, size = 0x400, scoped, tag = 'input window, operand 0, single buffered']
    #allocation3 [shape = 's32[1]{0}', space=sflag, size = 0x4, scoped, tag = 'scoped memory for tpu_custom_call.1']
    #allocation4 [shape = 's32[1]{0}', space=sflag, size = 0x4, scoped, tag = 'scoped memory for tpu_custom_call.1']
    #allocation5 [shape = 'u8[4096]{0}', space=vmem, size = 0x1000, scoped, tag = 'input window, operand 1, single buffered']
    #allocation6 [shape = 's32[1]{0}', space=sflag, size = 0x4, scoped, tag = 'scoped memory for tpu_custom_call.1']
    #allocation7 [shape = 'u8[512]{0}', space=vmem, size = 0x400, scoped, tag = 'output window, operand 0, single buffered']
    %7 = vsyncpa [#allocation3], 0
    %8 = vsyncpa [#allocation6], 0
    %9 = vsyncpa [#allocation4], 0
    // Predicated region
    $region2: #{tpu_custom_call.1} parent=1 // pred_check
      _
    $region3: #{tpu_custom_call.1} parent=1 // pred_check_branch
      %11 = sbr.rel (0) target = $region5
    $region4: #{tpu_custom_call.1} parent=1 // pred_region
      %s13 = ssub.s32 16, 16
      %14 = vsyncadd [#allocation3], %s13
      %s16 = sshll.u32 [#allocation2], 4
      %s17 = int_to_ptr.vmem [resolvable:$true] %s16
      %19 = dma.hbm_to_vmem [thread:$0]  %s0, 16, %s17, [#allocation3]
    $region5: #{tpu_custom_call.1} parent=1 // pred_fallthru
      _
    // Predicated region
    $region6: #{tpu_custom_call.1} parent=1 // pred_check
      _
    $region7: #{tpu_custom_call.1} parent=1 // pred_check_branch
      %21 = sbr.rel (0) target = $region9
    $region8: #{tpu_custom_call.1} parent=1 // pred_region
      %s23 = ssub.s32 128, 128
      %24 = vsyncadd [#allocation6], %s23
      %s26 = sshll.u32 [#allocation5], 4
      %s27 = int_to_ptr.vmem [resolvable:$true] %s26
      %29 = dma.hbm_to_vmem [thread:$0]  %s1, 128, %s27, [#allocation6]
    $region9: #{tpu_custom_call.1} parent=1 // pred_fallthru
      _
    // Predicated region
    $region10: #{tpu_custom_call.1} parent=1 // pred_check
      _
    $region11: #{tpu_custom_call.1} parent=1 // pred_check_branch
      %31 = sbr.rel (0) target = $region13
    $region12: #{tpu_custom_call.1} parent=1 // pred_region
      %32 = dma.done [#allocation3], 16
    $region13: #{tpu_custom_call.1} parent=1 // pred_fallthru
      _
    // Predicated region
    $region14: #{tpu_custom_call.1} parent=1 // pred_check
      _
    $region15: #{tpu_custom_call.1} parent=1 // pred_check_branch
      %34 = sbr.rel (0) target = $region17
    $region16: #{tpu_custom_call.1} parent=1 // pred_region
      %35 = dma.done [#allocation6], 128
    $region17: #{tpu_custom_call.1} parent=1 // pred_fallthru
      _
    %v36 = vld [vmem:[#allocation2] sm:$0x1]
    %v37 = vld [vmem:[#allocation5] sm:$0xff]
    %vm38 = vcmask 261120
    %v40 = vsel %vm38, %v36, 0
    %v43 = vsel %vm38, %v37, 0
    %45 = vmatprep.subr.mxu0 0.0
    %46 = vmatpush1.xpose.msra.mxu0 %v43
    %47 = vmatprep.subr.mxu0 0.0
    %48 = vmatpush1.xpose.msra.mxu0 0.0
    %49 = vmatprep.subr.mxu0 0.0
    %50 = vmatpush1.xpose.msra.mxu0 0.0
    %51 = vmatprep.subr.mxu0 0.0
    %52 = vmatpush1.xpose.msra.mxu0 0.0
    %53 = vmatprep.subr.mxu0 0.0
    %54 = vmatpush1.xpose.msra.mxu0 0.0
    %55 = vmatprep.subr.mxu0 0.0
    %56 = vmatpush1.xpose.msra.mxu0 0.0
    %57 = vmatprep.subr.mxu0 0.0
    %58 = vmatpush1.xpose.msra.mxu0 0.0
    %59 = vmatprep.subr.mxu0 0.0
    %60 = vmatpush1.xpose.msra.mxu0 0.0
    %61 = vmatprep.subr.mxu0 0.0
    %62 = vmatpush1.xpose.msra.mxu0 0.0
    %63 = vmatprep.subr.mxu0 0.0
    %64 = vmatpush1.xpose.msra.mxu0 0.0
    %65 = vmatprep.subr.mxu0 0.0
    %66 = vmatpush1.xpose.msra.mxu0 0.0
    %67 = vmatprep.subr.mxu0 0.0
    %68 = vmatpush1.xpose.msra.mxu0 0.0
    %69 = vmatprep.subr.mxu0 0.0
    %70 = vmatpush1.xpose.msra.mxu0 0.0
    %71 = vmatprep.subr.mxu0 0.0
    %72 = vmatpush1.xpose.msra.mxu0 0.0
    %73 = vmatprep.subr.mxu0 0.0
    %74 = vmatpush1.xpose.msra.mxu0 0.0
    %75 = vmatprep.subr.mxu0 0.0
    %76 = vmatpush1.xpose.msra.mxu0 0.0
    %77 = vmatprep.subr.mxu0 0.0
    %78 = vmatpush1.xpose.msra.mxu0 0.0
    %79 = vmatprep.subr.mxu0 0.0
    %80 = vmatpush1.xpose.msra.mxu0 0.0
    %81 = vmatprep.subr.mxu0 0.0
    %82 = vmatpush1.xpose.msra.mxu0 0.0
    %83 = vmatprep.subr.mxu0 0.0
    %84 = vmatpush1.xpose.msra.mxu0 0.0
    %85 = vmatprep.subr.mxu0 0.0
    %86 = vmatpush1.xpose.msra.mxu0 0.0
    %87 = vmatprep.subr.mxu0 0.0
    %88 = vmatpush1.xpose.msra.mxu0 0.0
    %89 = vmatprep.subr.mxu0 0.0
    %90 = vmatpush1.xpose.msra.mxu0 0.0
    %91 = vmatprep.subr.mxu0 0.0
    %92 = vmatpush1.xpose.msra.mxu0 0.0
    %93 = vmatprep.subr.mxu0 0.0
    %94 = vmatpush1.xpose.msra.mxu0 0.0
    %95 = vmatprep.subr.mxu0 0.0
    %96 = vmatpush1.xpose.msra.mxu0 0.0
    %97 = vmatprep.subr.mxu0 0.0
    %98 = vmatpush1.xpose.msra.mxu0 0.0
    %99 = vmatprep.subr.mxu0 0.0
    %100 = vmatpush1.xpose.msra.mxu0 0.0
    %101 = vmatprep.subr.mxu0 0.0
    %102 = vmatpush1.xpose.msra.mxu0 0.0
    %103 = vmatprep.subr.mxu0 0.0
    %104 = vmatpush1.xpose.msra.mxu0 0.0
    %105 = vmatprep.subr.mxu0 0.0
    %106 = vmatpush1.xpose.msra.mxu0 0.0
    %107 = vmatprep.subr.mxu0 0.0
    %108 = vmatpush1.xpose.msra.mxu0 0.0
    %109 = vmatprep.mubr.f32.mxu0 0.0
    %110 = vmatmul.mubr.f32.gmra.mrb[0].mxu0 %v40
    %v111 = vpop.f32.mrb[0].mxu0
    %v112 = vadd.f32 0.0, %v111
    %v113 = vpop.f32.mrb[0].mxu0
    %114 = vdwg.mxu0
    %v115 = vxor.u32 %v112, 2147483648
    %v116 = vmul.f32 %v115, 1.442695
    %v117 = vpow.pop %v116
    %v118 = vadd.f32 %v117, 1.0
    %v119 = vrcp.pop %v118
    %v120 = vmul.f32 1.0, %v119
    %v121 = vsub.f32 %v120, 0.01
    %v122 = vmax.f32 %v121, 0.001
    %v123 = vmin.f32 %v122, 1.0
    %vm124 = vcmask 57344
    %125 = vst.msk [vmem:[#allocation7] sm:$0x1] %vm124, %v123
    // Predicated region
    $region18: #{tpu_custom_call.1} parent=1 // pred_check
      _
    $region19: #{tpu_custom_call.1} parent=1 // pred_check_branch
      %127 = sbr.rel (0) target = $region21
    $region20: #{tpu_custom_call.1} parent=1 // pred_region
      %s129 = ssub.s32 16, 16
      %130 = vsyncadd [#allocation4], %s129
      %s132 = sshll.u32 [#allocation7], 4
      %s133 = int_to_ptr.vmem [resolvable:$true] %s132
      %135 = dma.vmem_to_hbm [thread:$0]  %s133, 16, %s2, [#allocation4]
    $region21: #{tpu_custom_call.1} parent=1 // pred_fallthru
      _
    // Predicated region
    $region22: #{tpu_custom_call.1} parent=1 // pred_check
      _
    $region23: #{tpu_custom_call.1} parent=1 // pred_check_branch
      %137 = sbr.rel (0) target = $region25
    $region24: #{tpu_custom_call.1} parent=1 // pred_region
      %138 = dma.done [#allocation4], 16
    $region25: #{tpu_custom_call.1} parent=1 // pred_fallthru
      _
    %139 = vsyncpa [#allocation3], 1
    %140 = vsyncpa [#allocation6], 1
    %141 = vsyncpa [#allocation4], 1

</llo_original>
